<compile_context>
chip_gen: v7x
topology: tpu7x:2x2x1
jax: 0.10.0
libtpu: 0.0.40
codegen_flags: <defaults>
</compile_context>

<pallas_src>
import functools
import math

import jax
import jax.numpy as jnp
import numpy as np
from jax.experimental import pallas as pl
from jax.experimental.pallas import tpu as pltpu


# ------------------------------ Pallas kernel ------------------------------ #

def _pad_kernel(x_ref, o_ref, *, fronts):
    """x_ref: (rows, *in_sp) tile; o_ref: (rows, *out_sp) tile.

    Zero-fill the whole output tile with a single dense full-tile store, then
    copy the input tile into the interior.  The interior double-write stays in
    VMEM (hidden under the HBM DMA) and this removes all the narrow masked
    border-strip stores of the previous per-axis formulation.
    """
    o_ref[...] = jnp.zeros(o_ref.shape, o_ref.dtype)
    interior = tuple(pl.ds(f, s) for f, s in zip(fronts, x_ref.shape[1:]))
    o_ref[(slice(None),) + interior] = x_ref[...]


# ------------------------------- glue (JAX) -------------------------------- #

def _to_list(x, length):
    if isinstance(x, (list, tuple)):
        xs = list(x)
        if len(xs) == 1:
            xs = xs * length
        assert len(xs) == length, (xs, length)
        return xs
    return [x] * length


def _pad_amounts(side, size):
    if side is None or size < 1:
        return 0, 0
    if side == 'front':
        return size, 0
    if side == 'both':
        return size // 2, math.ceil(size / 2)
    if side == 'end':
        return 0, size
    raise ValueError(f'pad side {side} unknown')


def _vmem_budget_bytes():
    """~75% of physical VMEM: ~48 MiB on v7x, ~96 MiB on v5e/v6e."""
    cap = 64 * 1024 * 1024                      # conservative default (= v7x)
    try:
        cap = int(getattr(pltpu.get_tpu_info(), "vmem_capacity_bytes", cap)) or cap
    except Exception:
        pass
    return (cap // 4) * 3


def _choose_row_block(n_rows, per_row_bytes, *, sublane_align, rows_on_sublanes,
                      vmem_budget_bytes):
    """Pick the number of flattened (B*C) rows handled per grid step.

    * per-step in+out footprint targets ~8 MiB (double-buffered ~32 MiB), so
      the ~0.35 us fixed grid-step overhead stays <10% of each step's DMA even
      at v7x HBM speed while still fitting every generation's VMEM budget.
    * >=2 grid steps whenever legal so dimension_semantics=("parallel",) can
      shard rows across the two v7x TensorCores (harmless on v5e/v6e).
    * 1-D spatial case (rows sit on the sublane axis): block aligned to the
      dtype's sublane packing (8 f32 / 16 bf16 / 32 int8) or equal to n_rows.
    * when a single row already exceeds the target, fall back to rb=1 (not 8)
      so the double-buffered footprint never blows past the VMEM limit.
    """
    align = sublane_align if rows_on_sublanes else 1
    target_step_bytes = min(8 * 1024 * 1024, vmem_budget_bytes // 6)
    rb = max(1, min(n_rows, target_step_bytes // per_row_bytes))

    steps = pl.cdiv(n_rows, rb)
    if steps == 1 and n_rows >= 2 * align:
        steps = 2                               # give the v7x megacore 2 steps
    rb = pl.cdiv(n_rows, steps)                 # most even split -> least ragged tail
    if rb < n_rows:
        rb = min(n_rows, pl.cdiv(rb, align) * align)
    return rb


def _pallas_pad(x_rows, fronts, out_sp):
    R = x_rows.shape[0]
    in_sp = tuple(x_rows.shape[1:])
    out_sp = tuple(out_sp)
    nsp = len(in_sp)
    itemsize = jnp.dtype(x_rows.dtype).itemsize
    sublane_align = max(8, 32 // itemsize)      # 8 f32 / 16 bf16 / 32 int8|fp8
    per_row_bytes = (int(np.prod(in_sp)) + int(np.prod(out_sp))) * itemsize
    vmem_budget = _vmem_budget_bytes()

    rb = _choose_row_block(
        R, per_row_bytes, sublane_align=sublane_align,
        rows_on_sublanes=(nsp == 1), vmem_budget_bytes=vmem_budget)

    idx_tail = (0,) * nsp
    index_map = lambda r: (r,) + idx_tail

    # Blocks span the full spatial extents, so both the input fetch and the
    # output writeback DMA are contiguous in the arrays' native tiled layout.
    # TODO(synk): add a second grid axis over the leading spatial dim (with
    # pl.when-gated front/end handling) for shapes where a single row exceeds
    # the per-step VMEM target (tiny B*C, huge spatial extents).
    return pl.pallas_call(
        functools.partial(_pad_kernel, fronts=tuple(fronts)),
        out_shape=jax.ShapeDtypeStruct((R,) + out_sp, x_rows.dtype),
        grid=(pl.cdiv(R, rb),),
        in_specs=[pl.BlockSpec((rb,) + in_sp, index_map)],
        out_specs=pl.BlockSpec((rb,) + out_sp, index_map),
        compiler_params=pltpu.CompilerParams(
            dimension_semantics=("parallel",),
            vmem_limit_bytes=vmem_budget),
    )(x_rows)


class Pad:
    """Mirrors padertorch Pad: constant padding of the spatial dims of x."""

    def __init__(self, side='both', mode='constant'):
        self.side = side
        self.mode = mode

    def __call__(self, x, size):
        if self.mode != 'constant':
            # TODO(synk): non-constant pad modes (reflect/replicate/circular) not implemented in Pallas.
            raise NotImplementedError(f'pad mode {self.mode} not supported')

        nsp = x.ndim - 2
        if nsp <= 0:
            return x
        sides = _to_list(self.side, nsp)
        sizes = _to_list(size, nsp)
        fronts, ends = [], []
        for sd, sz in zip(sides, sizes):
            f, e = _pad_amounts(sd, sz)
            fronts.append(f)
            ends.append(e)

        if all(f == 0 and e == 0 for f, e in zip(fronts, ends)):
            return x

        B, C = x.shape[0], x.shape[1]
        in_sp = tuple(x.shape[2:])
        out_sp = tuple(s + f + e for s, f, e in zip(in_sp, fronts, ends))

        x_rows = x.reshape((B * C,) + in_sp)    # leading-dim merge: layout free
        out_rows = _pallas_pad(x_rows, fronts, out_sp)
        return out_rows.reshape((B, C) + out_sp)


# --------------------------------- main ------------------------------------ #

if __name__ == "__main__":
    key = jax.random.PRNGKey(0)
    k2d, k1d, kbf = jax.random.split(key, 3)

    # 2-D spatial case: x (B, C, H, W) = (2, 4, 16, 16), size=(3, 5), side='both'
    B, C, H, W = 2, 4, 16, 16
    x2 = jax.random.normal(k2d, (B, C, H, W), dtype=jnp.float32)
    y_both = jax.block_until_ready(Pad(side='both')(x2, size=(3, 5)))
    ref_both = jnp.pad(x2, ((0, 0), (0, 0), (1, 2), (2, 3)))
    assert y_both.shape == (B, C, H + 3, W + 5)
    assert np.array_equal(np.asarray(y_both), np.asarray(ref_both))

    # Mixed sides on 2-D: H padded at the front, W padded at the end.
    y_mixed = jax.block_until_ready(Pad(side=['front', 'end'])(x2, size=4))
    ref_mixed = jnp.pad(x2, ((0, 0), (0, 0), (4, 0), (0, 4)))
    assert np.array_equal(np.asarray(y_mixed), np.asarray(ref_mixed))

    # bf16 2-D case (exercises the dtype-aware tiling path).
    xb = jax.random.normal(kbf, (B, C, H, W), dtype=jnp.bfloat16)
    y_bf = jax.block_until_ready(Pad(side='both')(xb, size=(4, 6)))
    ref_bf = jnp.pad(xb, ((0, 0), (0, 0), (2, 2), (3, 3)))
    assert y_bf.shape == (B, C, H + 4, W + 6)
    assert np.array_equal(np.asarray(y_bf.astype(jnp.float32)),
                          np.asarray(ref_bf.astype(jnp.float32)))

    # 1-D spatial case: x (B, C, T) = (2, 4, 16), side='end', size=5
    x1 = jax.random.normal(k1d, (2, 4, 16), dtype=jnp.float32)
    y_end = jax.block_until_ready(Pad(side='end')(x1, size=5))
    ref_end = jnp.pad(x1, ((0, 0), (0, 0), (0, 5)))
    assert np.array_equal(np.asarray(y_end), np.asarray(ref_end))

    # side=None / size<1 -> passthrough (matches module behaviour).
    y_none = Pad(side=None)(x1, size=3)
    assert y_none.shape == x1.shape
    y_zero = Pad(side='both')(x1, size=0)
    assert y_zero.shape == x1.shape

    print("KERNEL_OK")
</pallas_src>

<mosaic_0001>
module attributes {stable_mosaic.version = 11 : i64} {
  func.func @_pad_kernel(%arg0: i32, %arg1: memref<4x16x16xf32, #tpu.memory_space<vmem>>, %arg2: memref<4x19x21xf32, #tpu.memory_space<vmem>>) attributes {dimension_semantics = [#tpu.dimension_semantics<parallel>], iteration_bounds = array<i64: 2>, scalar_prefetch = 0 : i64, scratch_operands = 0 : i64, tpu.core_type = #tpu.core_type<tc>, window_params = [{transform_indices = @transform_0, window_bounds = array<i64: 4, 16, 16>}, {transform_indices = @transform_1, window_bounds = array<i64: 4, 19, 21>}]} {
    %cst = arith.constant 0.000000e+00 : f32
    %0 = vector.broadcast %cst : f32 to vector<4x19x21xf32>
    %c0 = arith.constant 0 : index
    %c0_0 = arith.constant 0 : index
    %c0_1 = arith.constant 0 : index
    %1 = vector.load %arg2[%c0, %c0_0, %c0_1] : memref<4x19x21xf32, #tpu.memory_space<vmem>>, vector<4x19x21xf32>
    tpu.vector_store %arg2[%c0, %c0_0, %c0_1], %0 {strides = array<i32>} : memref<4x19x21xf32, #tpu.memory_space<vmem>>, vector<4x19x21xf32>,
    %c0_2 = arith.constant 0 : index
    %c0_3 = arith.constant 0 : index
    %c0_4 = arith.constant 0 : index
    %2 = vector.load %arg1[%c0_2, %c0_3, %c0_4] : memref<4x16x16xf32, #tpu.memory_space<vmem>>, vector<4x16x16xf32>
    %c0_5 = arith.constant 0 : index
    %c1 = arith.constant 1 : index
    %c2 = arith.constant 2 : index
    %3 = vector.load %arg2[%c0_5, %c1, %c2] : memref<4x19x21xf32, #tpu.memory_space<vmem>>, vector<4x16x16xf32>
    tpu.vector_store %arg2[%c0_5, %c1, %c2], %2 {strides = array<i32>} : memref<4x19x21xf32, #tpu.memory_space<vmem>>, vector<4x16x16xf32>,
    return
  }
  func.func @transform_0(%arg0: i32) -> (i32, i32, i32) {
    %c0_i32 = arith.constant 0 : i32
    %c0_i32_0 = arith.constant 0 : i32
    %c0_i32_1 = arith.constant 0 : i32
    return %arg0, %c0_i32, %c0_i32_0 : i32, i32, i32
  }
  func.func @transform_1(%arg0: i32) -> (i32, i32, i32) {
    %c0_i32 = arith.constant 0 : i32
    %c0_i32_0 = arith.constant 0 : i32
    %c0_i32_1 = arith.constant 0 : i32
    return %arg0, %c0_i32, %c0_i32_0 : i32, i32, i32
  }
}

</mosaic_0001>

<llo_original>
// kernel: tpu_custom_call.1
$region0: #{tpu_custom_call.1}
  #allocation0 [shape = 'u32[]', space=smem, size = 0x4, offset = 0x4, fixed_abs, tag = 'smem constant byte address 0x4 - core index']
  #allocation1 [shape = 'u32[144,128]{1,0:T(1,128)}', space=vmem, size = 0x12000, scoped, tag = 'internal scratch']
  %s0 = inlined_call_operand.hbm [shape: f32[8,16,16], index: 0, kind: input, shape index: {}]
  %s1 = inlined_call_operand.vmem [shape: f32[8,19,21], index: 1, kind: output, shape index: {}]
  %s2 = sld [smem:[#allocation0]]
  $region41: #{tpu_custom_call.1} parent=0
    _
  %s4 = ssub.s32 1, %s2
  %s5 = scalar_select 0, %s4, %s2
  $region1: #{tpu_custom_call.1} parent=0
    #allocation2 [shape = 'u8[65536]{0}', space=vmem, size = 0x10000, scoped, tag = 'input window, operand 0']
    #allocation3 [shape = 's32[2]{0}', space=sflag, size = 0x8, scoped, tag = 'scoped memory for tpu_custom_call.1']
    %6 = vsyncpa [#allocation3], 0
    %s7 = scalar_lea.sflag [#allocation3], 1
    %8 = vsyncpa %s7, 0
    loop: start=0, step=1, limit=4
    $region2: #{tpu_custom_call.1} parent=1 // loop_pre_header
      _
    $region3: #{tpu_custom_call.1} parent=1 // loop_header
      %s10 = sphi 0, %s14
      %p11 = scmp.ge.s32.totalorder %s10, 4
      %s20 = sphi 0, %s22
      %s23 = sphi 0, %s20
      %s24 = sphi 0, %s23
      %s40 = sphi 0, %s24
      %s46 = sphi 0, %s48
      %s49 = sphi 0, %s46
      %s50 = sphi 0, %s49
      %s66 = sphi 0, %s50
    $region4: #{tpu_custom_call.1} parent=1 // loop_header_branch
      %13 = sbr.rel (%p11) target = $region8
    $region5: #{tpu_custom_call.1} parent=1 // loop_body
      %s15 = ssub.s32 %s10, 1
      %s16 = ssub.s32 %s10, 2
      %s17 = sadd.s32 %s10, 1
      %s18 = ssub.s32 %s10, %s17
      %p19 = scmp.eq.s32.totalorder %s18, 0
      %s21 = sadd.s32 %s20, 1
      %s22 = scalar_select %p19, %s20, %s21
      %p25 = pneg %p19
      %p26 = scmp.eq.s32.totalorder %s10, 1
      %p27 = por %p25, %p26
      %p28 = scmp.ne.s32.totalorder %s20, %s23
      %p29 = scmp.eq.s32.totalorder %s10, 0
      %p30 = por %p28, %p29
      %p31 = scmp.ne.s32.totalorder %s20, %s23
      %p32 = scmp.eq.s32.totalorder %s15, 1
      %p33 = por %p31, %p32
      %p34 = scmp.ne.s32.totalorder %s23, %s24
      %p35 = scmp.eq.s32.totalorder %s15, 0
      %p36 = por %p34, %p35
      %p37 = scmp.ne.s32.totalorder %s23, %s24
      %p38 = scmp.eq.s32.totalorder %s16, 1
      %p39 = por %p37, %p38
      %p41 = scmp.ne.s32.totalorder %s24, %s40
      %p42 = scmp.eq.s32.totalorder %s16, 0
      %p43 = por %p41, %p42
      %s44 = ssub.s32 %s10, %s17
      %p45 = scmp.eq.s32.totalorder %s44, 0
      %s47 = sadd.s32 %s46, 1
      %s48 = scalar_select %p45, %s46, %s47
      %p51 = pneg %p45
      %p52 = scmp.eq.s32.totalorder %s10, 1
      %p53 = por %p51, %p52
      %p54 = scmp.ne.s32.totalorder %s46, %s49
      %p55 = scmp.eq.s32.totalorder %s10, 0
      %p56 = por %p54, %p55
      %p57 = scmp.ne.s32.totalorder %s46, %s49
      %p58 = scmp.eq.s32.totalorder %s15, 1
      %p59 = por %p57, %p58
      %p60 = scmp.ne.s32.totalorder %s49, %s50
      %p61 = scmp.eq.s32.totalorder %s15, 0
      %p62 = por %p60, %p61
      %p63 = scmp.ne.s32.totalorder %s49, %s50
      %p64 = scmp.eq.s32.totalorder %s16, 1
      %p65 = por %p63, %p64
      %p67 = scmp.ne.s32.totalorder %s50, %s66
      %p68 = scmp.eq.s32.totalorder %s16, 0
      %p69 = por %p67, %p68
      %p70 = scmp.le.s32.totalorder 1, %s10
      %p71 = scmp.lt.s32.totalorder %s10, 3
      %p72 = pnand %p70, %p71
      %p73 = pneg %p72
      // Predicated region
      $region9: #{tpu_custom_call.1} parent=5 // pred_check
        _
      $region10: #{tpu_custom_call.1} parent=5 // pred_check_branch
        %75 = sbr.rel (%p72) target = $region12
      $region11: #{tpu_custom_call.1} parent=5 // pred_region
        %s76 = ssub.s32 %s10, 1
      $region12: #{tpu_custom_call.1} parent=5 // pred_fallthru
        _
      %p77 = scmp.lt.s32.totalorder %s10, 2
      // Predicated region
      $region13: #{tpu_custom_call.1} parent=5 // pred_check
        %p78 = pneg %p77
      $region14: #{tpu_custom_call.1} parent=5 // pred_check_branch
        %80 = sbr.rel (%p78) target = $region16
      $region15: #{tpu_custom_call.1} parent=5 // pred_region
        // Predicated region
        $region17: #{tpu_custom_call.1} parent=15 // pred_check
          %p81 = pneg %p30
        $region18: #{tpu_custom_call.1} parent=15 // pred_check_branch
          %83 = sbr.rel (%p81) target = $region20
        $region19: #{tpu_custom_call.1} parent=15 // pred_region
          %s84 = sand.u32 %s20, 1
          %s85 = scalar_lea.sflag [#allocation3], %s84
          %s86 = sand.u32 %s20, 1
          %s87 = smul.addr %s86, 64
          %s88 = scalar_lea.vmem [#allocation2], %s87
          %s89 = smul.u32 4, %s10
          %s91 = ssub.s32 1024, 1024
          %92 = vsyncadd %s85, %s91
          %s93 = smul.addr %s89, 2
          %s94 = smul.addr %s93, 128
          %s95 = scalar_lea.hbm %s0, %s94
          %s96 = sshll.u32 %s88, 4
          %s97 = int_to_ptr.vmem [resolvable:$true] %s96
          %102 = dma.hbm_to_vmem [thread:$0]  %s95, 1024, %s97, %s85, 128, 128, 8
        $region20: #{tpu_custom_call.1} parent=15 // pred_fallthru
          _
      $region16: #{tpu_custom_call.1} parent=5 // pred_fallthru
        _
      %p103 = scmp.le.s32.totalorder 1, %s10
      %p104 = scmp.lt.s32.totalorder %s10, 3
      %p105 = pnand %p103, %p104
      %p106 = pneg %p105
      // Predicated region
      $region21: #{tpu_custom_call.1} parent=5 // pred_check
        _
      $region22: #{tpu_custom_call.1} parent=5 // pred_check_branch
        %108 = sbr.rel (%p105) target = $region24
      $region23: #{tpu_custom_call.1} parent=5 // pred_region
        %s109 = ssub.s32 %s10, 1
        %s110 = sand.u32 %s23, 1
        %s111 = scalar_lea.sflag [#allocation3], %s110
        %s112 = sand.u32 %s23, 1
        %s113 = smul.addr %s112, 64
        %s114 = scalar_lea.vmem [#allocation2], %s113
        // Predicated region
        $region25: #{tpu_custom_call.1} parent=23 // pred_check
          %p115 = pneg %p36
        $region26: #{tpu_custom_call.1} parent=23 // pred_check_branch
          %117 = sbr.rel (%p115) target = $region28
        $region27: #{tpu_custom_call.1} parent=23 // pred_region
          %118 = dma.done %s111, 1024
        $region28: #{tpu_custom_call.1} parent=23 // pred_fallthru
          _
        %s119 = sand.u32 %s23, 1
        %s120 = scalar_lea.sflag [#allocation3], %s119
        %s121 = sand.u32 %s23, 1
        %s122 = smul.addr %s121, 64
        %s123 = scalar_lea.vmem [#allocation2], %s122
        %p124 = pneg %p36
        %p125 = pneg %p33
        %p126 = pneg %p62
        %p127 = pneg %p59
        %s128 = smul.u32 4, %s15
        %p129 = scmp.lt.s32.totalorder %s128, 7
        %s130 = scalar_select %p129, %s128, 7
        %s131 = smul.addr %s130, 3
        %s132 = smul.addr %s131, 8
        %s133 = scalar_lea.vmem %s1, %s132
        %s134 = smul.u32 4, %s15
        %s135 = smul.u32 4, %s15
        %p136 = scmp.lt.s32.totalorder %s135, 7
        %s137 = scalar_select %p136, %s135, 7
        %s138 = smul.addr %s137, 3
        %s139 = smul.addr %s138, 8
        %s140 = scalar_lea.vmem %s1, %s139
        %s141 = smul.u32 4, %s15
        %vm142 = vcmask 171008
        %143 = vst.msk [vmem:[%s140] sm:$0xff] %vm142, 0.0
        %144 = vst.msk [vmem:[%s140 + $0x8] sm:$0xff] %vm142, 0.0
        %vm145 = vcmask 165888
        %146 = vst.msk [vmem:[%s140 + $0x10] sm:$0x7] %vm145, 0.0
        %147 = vst.msk [vmem:[%s140 + $0x18] sm:$0xff] %vm142, 0.0
        %148 = vst.msk [vmem:[%s140 + $0x20] sm:$0xff] %vm142, 0.0
        %149 = vst.msk [vmem:[%s140 + $0x28] sm:$0x7] %vm145, 0.0
        %150 = vst.msk [vmem:[%s140 + $0x30] sm:$0xff] %vm142, 0.0
        %151 = vst.msk [vmem:[%s140 + $0x38] sm:$0xff] %vm142, 0.0
        %152 = vst.msk [vmem:[%s140 + $0x40] sm:$0x7] %vm145, 0.0
        %153 = vst.msk [vmem:[%s140 + $0x48] sm:$0xff] %vm142, 0.0
        %154 = vst.msk [vmem:[%s140 + $0x50] sm:$0xff] %vm142, 0.0
        %155 = vst.msk [vmem:[%s140 + $0x58] sm:$0x7] %vm145, 0.0
        %v156 = vld [vmem:[%s114] sm:$0xff]
        %v157 = vld [vmem:[%s114 + $0x8] sm:$0xff]
        %v158 = vld [vmem:[%s114 + $0x10] sm:$0xff]
        %v159 = vld [vmem:[%s114 + $0x18] sm:$0xff]
        %v160 = vld [vmem:[%s114 + $0x20] sm:$0xff]
        %v161 = vld [vmem:[%s114 + $0x28] sm:$0xff]
        %v162 = vld [vmem:[%s114 + $0x30] sm:$0xff]
        %v163 = vld [vmem:[%s114 + $0x38] sm:$0xff]
        %172 = vrot.lane.b32.xlu0 %v156, 2
        %v173 = vpop.permute.xlu0 %172
        %174 = vrot.lane.b32.xlu0 %v157, 2
        %v175 = vpop.permute.xlu0 %174
        %176 = vrot.lane.b32.xlu0 %v158, 2
        %v177 = vpop.permute.xlu0 %176
        %178 = vrot.lane.b32.xlu0 %v159, 2
        %v179 = vpop.permute.xlu0 %178
        %180 = vrot.lane.b32.xlu0 %v160, 2
        %v181 = vpop.permute.xlu0 %180
        %182 = vrot.lane.b32.xlu0 %v161, 2
        %v183 = vpop.permute.xlu0 %182
        %184 = vrot.lane.b32.xlu0 %v162, 2
        %v185 = vpop.permute.xlu0 %184
        %186 = vrot.lane.b32.xlu0 %v163, 2
        %v187 = vpop.permute.xlu0 %186
        %vm196 = vcmask 146448
        %197 = vst.msk [vmem:[%s140 + $0x1] sm:$0xff] %vm196, %v173
        %198 = vst.msk [vmem:[%s140 + $0x9] sm:$0xff] %vm196, %v175
        %199 = vst.msk [vmem:[%s140 + $0x19] sm:$0xff] %vm196, %v177
        %200 = vst.msk [vmem:[%s140 + $0x21] sm:$0xff] %vm196, %v179
        %201 = vst.msk [vmem:[%s140 + $0x31] sm:$0xff] %vm196, %v181
        %202 = vst.msk [vmem:[%s140 + $0x39] sm:$0xff] %vm196, %v183
        %203 = vst.msk [vmem:[%s140 + $0x49] sm:$0xff] %vm196, %v185
        %204 = vst.msk [vmem:[%s140 + $0x51] sm:$0xff] %vm196, %v187
        %s205 = smul.u32 4, %s15
        %p206 = scmp.lt.s32.totalorder %s205, 7
        %s207 = scalar_select %p206, %s205, 7
        %s208 = smul.addr %s207, 3
        %s209 = smul.addr %s208, 8
        %s210 = scalar_lea.vmem %s1, %s209
        // Predicated region
        $region29: #{tpu_custom_call.1} parent=23 // pred_check
          %p211 = pneg %p59
        $region30: #{tpu_custom_call.1} parent=23 // pred_check_branch
          %213 = sbr.rel (%p211) target = $region32
        $region31: #{tpu_custom_call.1} parent=23 // pred_region
          %s214 = smul.u32 4, %s15
        $region32: #{tpu_custom_call.1} parent=23 // pred_fallthru
          _
      $region24: #{tpu_custom_call.1} parent=5 // pred_fallthru
        _
      %p215 = scmp.le.s32.totalorder 2, %s10
      // Predicated region
      $region33: #{tpu_custom_call.1} parent=5 // pred_check
        %p216 = pneg %p215
      $region34: #{tpu_custom_call.1} parent=5 // pred_check_branch
        %218 = sbr.rel (%p216) target = $region36
      $region35: #{tpu_custom_call.1} parent=5 // pred_region
        %s219 = ssub.s32 %s10, 2
        // Predicated region
        $region37: #{tpu_custom_call.1} parent=35 // pred_check
          %p220 = pneg %p65
        $region38: #{tpu_custom_call.1} parent=35 // pred_check_branch
          %222 = sbr.rel (%p220) target = $region40
        $region39: #{tpu_custom_call.1} parent=35 // pred_region
          %s223 = smul.u32 4, %s16
          %p224 = scmp.lt.s32.totalorder %s223, 7
          %s225 = scalar_select %p224, %s223, 7
          %s226 = smul.addr %s225, 3
          %s227 = smul.addr %s226, 8
          %s228 = scalar_lea.vmem %s1, %s227
        $region40: #{tpu_custom_call.1} parent=35 // pred_fallthru
          _
      $region36: #{tpu_custom_call.1} parent=5 // pred_fallthru
        _
    $region6: #{tpu_custom_call.1} parent=1 // loop_footer
      %s14 = sadd.s32 1, %s10
    $region7: #{tpu_custom_call.1} parent=1 // loop_footer_branch
      %9 = sbr.rel target = $region3
    $region8: #{tpu_custom_call.1} parent=1 // loop_exit
      _
    %229 = vsyncpa [#allocation3], 1
    %s230 = scalar_lea.sflag [#allocation3], 1
    %231 = vsyncpa %s230, 1

</llo_original>
